<compile_context>
chip_gen: v7x
topology: tpu7x:2x2x1
jax: 0.10.0
libtpu: 0.0.40
codegen_flags: <defaults>
</compile_context>

<pallas_src>
import functools

import jax
import jax.numpy as jnp
from jax.experimental import pallas as pl
from jax.experimental.pallas import tpu as pltpu


def _round_up(x, m):
    return (x + m - 1) // m * m


def _pick_row_tile(n_rows, k, c_pad, budget_bytes=16 * 1024 * 1024):
    """Largest multiple-of-8 row tile whose double-buffered tiles fit the VMEM budget."""
    per_row = 2 * (k * 2) + 2 * (c_pad * 4)  # bf16 input tile + f32 output tile, x2 buffers
    tm = budget_bytes // max(per_row, 1)
    tm = min(1024, tm)
    tm = min(tm, _round_up(n_rows, 8))
    tm = max(8, (tm // 8) * 8)
    return int(tm)


def _stats_kernel(x_ref, w_ref, stats_ref, *, n_rows, tm):
    """Pass 1: conv-as-matmul on the row tile, streaming per-channel mean / M2.

    stats_ref (2, C_pad) is a resident accumulator: row 0 = running mean, row 1 = running M2
    (sum of squared deviations); finalized to the biased batch variance on the last tile.
    """
    i = pl.program_id(0)
    y = jnp.dot(x_ref[...], w_ref[...], preferred_element_type=jnp.float32)  # (tm, C_pad) f32

    row0 = i * tm
    row_ids = jax.lax.broadcasted_iota(jnp.int32, (tm, 1), 0) + row0
    valid = row_ids < n_rows                                    # mask padded rows
    n_t = jnp.minimum(tm, n_rows - row0).astype(jnp.float32)    # true rows in this tile

    y_masked = jnp.where(valid, y, 0.0)
    sum_t = jnp.sum(y_masked, axis=0, keepdims=True)            # (1, C_pad)
    mean_t = sum_t / n_t
    dev = jnp.where(valid, y - mean_t, 0.0)
    m2_t = jnp.sum(dev * dev, axis=0, keepdims=True)            # (1, C_pad)

    @pl.when(i == 0)
    def _():
        stats_ref[0:1, :] = mean_t
        stats_ref[1:2, :] = m2_t

    @pl.when(i > 0)
    def _():
        count = (i * tm).astype(jnp.float32)   # all tiles before this one are full
        total = count + n_t
        mean_old = stats_ref[0:1, :]
        m2_old = stats_ref[1:2, :]
        delta = mean_t - mean_old
        stats_ref[0:1, :] = mean_old + delta * (n_t / total)
        stats_ref[1:2, :] = m2_old + m2_t + (delta * delta) * (count * n_t / total)

    @pl.when(i == pl.num_programs(0) - 1)
    def _():
        stats_ref[1:2, :] = stats_ref[1:2, :] * (1.0 / n_rows)  # biased batch variance


def _apply_kernel(x_ref, w_ref, gamma_ref, beta_ref, stats_ref, o_ref, *, eps):
    """Pass 2: recompute the tile matmul, apply fused BatchNorm scale/shift + ELU."""
    y = jnp.dot(x_ref[...], w_ref[...], preferred_element_type=jnp.float32)  # (tm, C_pad)
    mean = stats_ref[0:1, :]
    var = stats_ref[1:2, :]
    scale = gamma_ref[...] * jax.lax.rsqrt(var + eps)   # (1, C_pad), f32
    shift = beta_ref[...] - mean * scale
    z = y * scale + shift
    # ELU(alpha=1): expm1 avoids cancellation near 0 at the same EUP cost as exp.
    o_ref[...] = jnp.where(z > 0, z, jnp.expm1(jnp.minimum(z, 0.0))).astype(o_ref.dtype)


def conv_layer_forward(x, weight, bias, gamma, beta, *, window_size, eps=1e-5):
    """Forward of ConvLayer.  x: (B, C, L) f32; weight: (C, C, W); bias/gamma/beta: (C,).

    Returns (B, C, L // W) f32.  `bias` is accepted for API parity but unused inside the
    kernel: training-mode BatchNorm's batch-mean subtraction cancels it exactly.
    """
    del bias  # exactly cancelled by the BatchNorm batch-mean subtraction
    B, C, L = x.shape
    W = window_size
    Lout = L // W
    N = B * Lout
    K = C * W
    C_pad = _round_up(C, 128)            # lane-dense matmul-N / output lanes

    TM = _pick_row_tile(N, K, C_pad)
    N_pad = _round_up(N, TM)
    num_tiles = N_pad // TM

    # Glue (XLA): carve non-overlapping conv windows into matmul rows; cast to bf16 so the
    # HBM copy produced by this transpose is half-width and the kernel DMAs bf16.
    # TODO(synk): the (B,C,L)->(B*Lout,C*W) windowing transpose is still one XLA HBM
    # round-trip; doing it in-kernel needs a (C,W)-contracting dot_general relayout that
    # Mosaic handles poorly for tiny W.
    x2d = (
        x[:, :, : Lout * W]
        .reshape(B, C, Lout, W)
        .transpose(0, 2, 1, 3)
        .reshape(N, K)
        .astype(jnp.bfloat16)
    )
    if N_pad != N:
        x2d = jnp.pad(x2d, ((0, N_pad - N), (0, 0)))

    # (C_out, C_in, W) -> (K = C_in*W, C_out), zero-padded to 128 output lanes, bf16.
    w2d = jnp.pad(weight.reshape(C, K).T, ((0, 0), (0, C_pad - C))).astype(jnp.bfloat16)
    g2d = jnp.pad(gamma.reshape(1, C), ((0, 0), (0, C_pad - C))).astype(jnp.float32)
    b2d = jnp.pad(beta.reshape(1, C), ((0, 0), (0, C_pad - C))).astype(jnp.float32)

    x_spec = pl.BlockSpec((TM, K), lambda i: (i, 0))
    w_spec = pl.BlockSpec((K, C_pad), lambda i: (0, 0))     # resident across the grid
    vec_spec = pl.BlockSpec((1, C_pad), lambda i: (0, 0))
    stats_spec = pl.BlockSpec((2, C_pad), lambda i: (0, 0))

    # Pass 1: per-channel batch mean / variance (streaming combine over row tiles).
    stats = pl.pallas_call(
        functools.partial(_stats_kernel, n_rows=N, tm=TM),
        out_shape=jax.ShapeDtypeStruct((2, C_pad), jnp.float32),
        grid_spec=pltpu.PrefetchScalarGridSpec(
            num_scalar_prefetch=0,
            grid=(num_tiles,),
            in_specs=[x_spec, w_spec],
            out_specs=stats_spec,
        ),
        compiler_params=pltpu.CompilerParams(
            dimension_semantics=("arbitrary",),      # resident accumulator output
            vmem_limit_bytes=32 * 1024 * 1024,
        ),
    )(x2d, w2d)

    # Pass 2: recompute tile matmul, normalize + ELU (independent tiles -> parallel).
    out2d = pl.pallas_call(
        functools.partial(_apply_kernel, eps=eps),
        out_shape=jax.ShapeDtypeStruct((N_pad, C_pad), jnp.float32),
        grid_spec=pltpu.PrefetchScalarGridSpec(
            num_scalar_prefetch=0,
            grid=(num_tiles,),
            in_specs=[x_spec, w_spec, vec_spec, vec_spec, stats_spec],
            out_specs=pl.BlockSpec((TM, C_pad), lambda i: (i, 0)),
        ),
        compiler_params=pltpu.CompilerParams(
            dimension_semantics=("parallel",),
            vmem_limit_bytes=32 * 1024 * 1024,
        ),
    )(x2d, w2d, g2d, b2d, stats)

    # TODO(synk): final NCL permute stays in XLA; it is W x smaller than the input copy.
    return out2d[:N, :C].reshape(B, Lout, C).transpose(0, 2, 1)


def _reference(x, weight, bias, gamma, beta, window_size, eps=1e-5):
    """Pure-JAX f32 reference: Conv1d(stride=W) + BatchNorm1d(train) + ELU."""
    B, C, L = x.shape
    W = window_size
    Lout = L // W
    xw = x[:, :, : Lout * W].reshape(B, C, Lout, W)
    y = jnp.einsum("bctw,ocw->bot", xw, weight) + bias[None, :, None]
    mean = y.mean(axis=(0, 2), keepdims=True)
    var = ((y - mean) ** 2).mean(axis=(0, 2), keepdims=True)
    z = gamma[None, :, None] * (y - mean) * jax.lax.rsqrt(var + eps) + beta[None, :, None]
    return jnp.where(z > 0, z, jnp.expm1(z))


if __name__ == "__main__":
    key = jax.random.PRNGKey(0)
    k_x, k_w, k_b = jax.random.split(key, 3)

    B, C, L = 2, 4, 16
    window_size = 4

    x = jax.random.normal(k_x, (B, C, L), dtype=jnp.float32)

    # Deterministic parameter init mirroring the module's __init__:
    #  - Conv1d weight: kaiming_normal_(fan_in, leaky_relu) -> std ~= sqrt(2 / fan_in)
    #  - Conv1d bias:   PyTorch default uniform(-1/sqrt(fan_in), 1/sqrt(fan_in))
    #  - BatchNorm1d:   gamma = 1, beta = 0
    fan_in = C * window_size
    w_std = (2.0 / fan_in) ** 0.5
    weight = w_std * jax.random.normal(k_w, (C, C, window_size), dtype=jnp.float32)
    bound = 1.0 / (fan_in ** 0.5)
    bias = jax.random.uniform(k_b, (C,), dtype=jnp.float32, minval=-bound, maxval=bound)
    gamma = jnp.ones((C,), dtype=jnp.float32)
    beta = jnp.zeros((C,), dtype=jnp.float32)

    out = conv_layer_forward(x, weight, bias, gamma, beta, window_size=window_size)
    jax.block_until_ready(out)
    assert out.shape == (B, C, L // window_size), out.shape

    ref = _reference(x, weight, bias, gamma, beta, window_size)
    max_err = float(jnp.max(jnp.abs(out - ref)))
    assert max_err < 0.1, f"mismatch vs reference: max abs err = {max_err}"
    print("KERNEL_OK")
</pallas_src>

<mosaic_0001>
module attributes {stable_mosaic.version = 11 : i64} {
  func.func @_stats_kernel(%arg0: i32, %arg1: memref<8x16xbf16, #tpu.memory_space<vmem>>, %arg2: memref<16x128xbf16, #tpu.memory_space<vmem>>, %arg3: memref<2x128xf32, #tpu.memory_space<vmem>>) attributes {dimension_semantics = [#tpu.dimension_semantics<arbitrary>], iteration_bounds = array<i64: 1>, scalar_prefetch = 0 : i64, scratch_operands = 0 : i64, tpu.core_type = #tpu.core_type<tc>, window_params = [{transform_indices = @transform_0, window_bounds = array<i64: 8, 16>}, {pipeline_mode = #tpu.pipeline_mode<synchronous>, transform_indices = @transform_1, window_bounds = array<i64: 16, 128>}, {pipeline_mode = #tpu.pipeline_mode<synchronous>, transform_indices = @transform_2, window_bounds = array<i64: 2, 128>}]} {
    %c0 = arith.constant 0 : index
    %c0_0 = arith.constant 0 : index
    %0 = vector.load %arg1[%c0, %c0_0] : memref<8x16xbf16, #tpu.memory_space<vmem>>, vector<8x16xbf16>
    %c0_1 = arith.constant 0 : index
    %c0_2 = arith.constant 0 : index
    %1 = vector.load %arg2[%c0_1, %c0_2] : memref<16x128xbf16, #tpu.memory_space<vmem>>, vector<16x128xbf16>
    %cst = arith.constant dense<0.000000e+00> : vector<8x128xf32>
    %2 = tpu.matmul %0, %1, %cst {dimension_numbers = #tpu.dot_dimension_numbers<[1], [0], [0], [1], [0, 0, 1, 1], [], []>} : vector<8x16xbf16>, vector<16x128xbf16>, vector<8x128xf32> -> vector<8x128xf32>
    %c8_i32 = arith.constant 8 : i32
    %3 = arith.muli %arg0, %c8_i32 : i32
    %4 = tpu.iota {dimensions = array<i32: 0>} : vector<8x1xi32>
    %5 = vector.broadcast %3 : i32 to vector<8x1xi32>
    %6 = arith.addi %4, %5 : vector<8x1xi32>
    %c8_i32_3 = arith.constant 8 : i32
    %7 = vector.broadcast %c8_i32_3 : i32 to vector<8x1xi32>
    %8 = arith.cmpi slt, %6, %7 : vector<8x1xi32>
    %c8_i32_4 = arith.constant 8 : i32
    %9 = arith.subi %c8_i32_4, %3 : i32
    %c8_i32_5 = arith.constant 8 : i32
    %10 = arith.minsi %c8_i32_5, %9 : i32
    %11 = arith.sitofp %10 : i32 to f32
    %cst_6 = arith.constant 0.000000e+00 : f32
    %12 = vector.shape_cast %8 : vector<8x1xi1> to vector<8x1xi1>
    %13 = vector.broadcast %12 : vector<8x1xi1> to vector<8x128xi1>
    %14 = vector.broadcast %cst_6 : f32 to vector<8x128xf32>
    %15 = arith.select %13, %2, %14 : vector<8x128xi1>, vector<8x128xf32>
    %cst_7 = arith.constant dense<0.000000e+00> : vector<128xf32>
    %16 = vector.multi_reduction <add>, %15, %cst_7 [0] : vector<8x128xf32> to vector<128xf32>
    %17 = vector.shape_cast %16 : vector<128xf32> to vector<1x128xf32>
    %18 = vector.broadcast %11 : f32 to vector<1x128xf32>
    %19 = arith.divf %17, %18 : vector<1x128xf32>
    %20 = vector.broadcast %19 : vector<1x128xf32> to vector<8x128xf32>
    %21 = arith.subf %2, %20 : vector<8x128xf32>
    %cst_8 = arith.constant 0.000000e+00 : f32
    %22 = vector.shape_cast %8 : vector<8x1xi1> to vector<8x1xi1>
    %23 = vector.broadcast %22 : vector<8x1xi1> to vector<8x128xi1>
    %24 = vector.broadcast %cst_8 : f32 to vector<8x128xf32>
    %25 = arith.select %23, %21, %24 : vector<8x128xi1>, vector<8x128xf32>
    %26 = arith.mulf %25, %25 : vector<8x128xf32>
    %cst_9 = arith.constant dense<0.000000e+00> : vector<128xf32>
    %27 = vector.multi_reduction <add>, %26, %cst_9 [0] : vector<8x128xf32> to vector<128xf32>
    %28 = vector.shape_cast %27 : vector<128xf32> to vector<1x128xf32>
    %c0_i32 = arith.constant 0 : i32
    %29 = arith.cmpi eq, %arg0, %c0_i32 : i32
    %30 = arith.extui %29 : i1 to i32
    %c0_i32_10 = arith.constant 0 : i32
    %31 = arith.cmpi ne, %30, %c0_i32_10 : i32
    scf.if %31 {
      %c0_15 = arith.constant 0 : index
      %c0_16 = arith.constant 0 : index
      %38 = vector.load %arg3[%c0_15, %c0_16] : memref<2x128xf32, #tpu.memory_space<vmem>>, vector<1x128xf32>
      tpu.vector_store %arg3[%c0_15, %c0_16], %19 {strides = array<i32>} : memref<2x128xf32, #tpu.memory_space<vmem>>, vector<1x128xf32>,
      %c1 = arith.constant 1 : index
      %c0_17 = arith.constant 0 : index
      %39 = vector.load %arg3[%c1, %c0_17] : memref<2x128xf32, #tpu.memory_space<vmem>>, vector<1x128xf32>
      tpu.vector_store %arg3[%c1, %c0_17], %28 {strides = array<i32>} : memref<2x128xf32, #tpu.memory_space<vmem>>, vector<1x128xf32>,
    } else {
    }
    %c0_i32_11 = arith.constant 0 : i32
    %32 = arith.cmpi sgt, %arg0, %c0_i32_11 : i32
    %33 = arith.extui %32 : i1 to i32
    %c0_i32_12 = arith.constant 0 : i32
    %34 = arith.cmpi ne, %33, %c0_i32_12 : i32
    scf.if %34 {
      %c8_i32_15 = arith.constant 8 : i32
      %38 = arith.muli %arg0, %c8_i32_15 : i32
      %39 = arith.sitofp %38 : i32 to f32
      %40 = arith.addf %39, %11 : f32
      %c0_16 = arith.constant 0 : index
      %c0_17 = arith.constant 0 : index
      %41 = vector.load %arg3[%c0_16, %c0_17] : memref<2x128xf32, #tpu.memory_space<vmem>>, vector<1x128xf32>
      %c1 = arith.constant 1 : index
      %c0_18 = arith.constant 0 : index
      %42 = vector.load %arg3[%c1, %c0_18] : memref<2x128xf32, #tpu.memory_space<vmem>>, vector<1x128xf32>
      %43 = arith.subf %19, %41 : vector<1x128xf32>
      %44 = arith.divf %11, %40 : f32
      %45 = vector.broadcast %44 : f32 to vector<1x128xf32>
      %46 = arith.mulf %43, %45 : vector<1x128xf32>
      %47 = arith.addf %41, %46 : vector<1x128xf32>
      %c0_19 = arith.constant 0 : index
      %c0_20 = arith.constant 0 : index
      %48 = vector.load %arg3[%c0_19, %c0_20] : memref<2x128xf32, #tpu.memory_space<vmem>>, vector<1x128xf32>
      tpu.vector_store %arg3[%c0_19, %c0_20], %47 {strides = array<i32>} : memref<2x128xf32, #tpu.memory_space<vmem>>, vector<1x128xf32>,
      %49 = arith.addf %42, %28 : vector<1x128xf32>
      %50 = arith.mulf %43, %43 : vector<1x128xf32>
      %51 = arith.mulf %39, %11 : f32
      %52 = arith.divf %51, %40 : f32
      %53 = vector.broadcast %52 : f32 to vector<1x128xf32>
      %54 = arith.mulf %50, %53 : vector<1x128xf32>
      %55 = arith.addf %49, %54 : vector<1x128xf32>
      %c1_21 = arith.constant 1 : index
      %c0_22 = arith.constant 0 : index
      %56 = vector.load %arg3[%c1_21, %c0_22] : memref<2x128xf32, #tpu.memory_space<vmem>>, vector<1x128xf32>
      tpu.vector_store %arg3[%c1_21, %c0_22], %55 {strides = array<i32>} : memref<2x128xf32, #tpu.memory_space<vmem>>, vector<1x128xf32>,
    } else {
    }
    %c0_i32_13 = arith.constant 0 : i32
    %35 = arith.cmpi eq, %arg0, %c0_i32_13 : i32
    %36 = arith.extui %35 : i1 to i32
    %c0_i32_14 = arith.constant 0 : i32
    %37 = arith.cmpi ne, %36, %c0_i32_14 : i32
    scf.if %37 {
      %c1 = arith.constant 1 : index
      %c0_15 = arith.constant 0 : index
      %38 = vector.load %arg3[%c1, %c0_15] : memref<2x128xf32, #tpu.memory_space<vmem>>, vector<1x128xf32>
      %cst_16 = arith.constant 1.250000e-01 : f32
      %39 = vector.broadcast %cst_16 : f32 to vector<1x128xf32>
      %40 = arith.mulf %38, %39 : vector<1x128xf32>
      %c1_17 = arith.constant 1 : index
      %c0_18 = arith.constant 0 : index
      %41 = vector.load %arg3[%c1_17, %c0_18] : memref<2x128xf32, #tpu.memory_space<vmem>>, vector<1x128xf32>
      tpu.vector_store %arg3[%c1_17, %c0_18], %40 {strides = array<i32>} : memref<2x128xf32, #tpu.memory_space<vmem>>, vector<1x128xf32>,
    } else {
    }
    return
  }
  func.func @transform_0(%arg0: i32) -> (i32, i32) {
    %c0_i32 = arith.constant 0 : i32
    %c0_i32_0 = arith.constant 0 : i32
    return %arg0, %c0_i32 : i32, i32
  }
  func.func @transform_1(%arg0: i32) -> (i32, i32) {
    %c0_i32 = arith.constant 0 : i32
    %c0_i32_0 = arith.constant 0 : i32
    %c0_i32_1 = arith.constant 0 : i32
    return %c0_i32, %c0_i32_0 : i32, i32
  }
  func.func @transform_2(%arg0: i32) -> (i32, i32) {
    %c0_i32 = arith.constant 0 : i32
    %c0_i32_0 = arith.constant 0 : i32
    %c0_i32_1 = arith.constant 0 : i32
    return %c0_i32, %c0_i32_0 : i32, i32
  }
}

</mosaic_0001>

<llo_original>
// kernel: tpu_custom_call.1
$region0: #{tpu_custom_call.1}
  #allocation0 [shape = 'u32[]', space=smem, size = 0x4, offset = 0x4, fixed_abs, tag = 'smem constant byte address 0x4 - core index']
  #allocation1 [shape = 'u32[144,128]{1,0:T(1,128)}', space=vmem, size = 0x12000, scoped, tag = 'internal scratch']
  %s0 = inlined_call_operand.hbm [shape: bf16[8,16], index: 0, kind: input, shape index: {}]
  %s1 = inlined_call_operand.hbm [shape: bf16[16,128], index: 1, kind: input, shape index: {}]
  %s2 = inlined_call_operand.hbm [shape: f32[2,128], index: 2, kind: output, shape index: {}]
  %s3 = sld [smem:[#allocation0]]
  $region38: #{tpu_custom_call.1} parent=0
    _
  %s5 = ssub.s32 1, %s3
  %s6 = scalar_select 0, %s5, %s3
  $region1: #{tpu_custom_call.1} parent=0
    #allocation2 [shape = 'u8[2048]{0}', space=vmem, size = 0x800, scoped, tag = 'input window, operand 0, single buffered']
    #allocation3 [shape = 's32[1]{0}', space=sflag, size = 0x4, scoped, tag = 'scoped memory for tpu_custom_call.1']
    #allocation4 [shape = 's32[1]{0}', space=sflag, size = 0x4, scoped, tag = 'scoped memory for tpu_custom_call.1']
    #allocation5 [shape = 'u8[4096]{0}', space=vmem, size = 0x1000, scoped, tag = 'input window, operand 1, single buffered']
    #allocation6 [shape = 's32[1]{0}', space=sflag, size = 0x4, scoped, tag = 'scoped memory for tpu_custom_call.1']
    #allocation7 [shape = 'u8[1024]{0}', space=vmem, size = 0x400, scoped, tag = 'output window, operand 0, single buffered']
    %7 = vsyncpa [#allocation3], 0
    %8 = vsyncpa [#allocation6], 0
    %9 = vsyncpa [#allocation4], 0
    // Predicated region
    $region2: #{tpu_custom_call.1} parent=1 // pred_check
      _
    $region3: #{tpu_custom_call.1} parent=1 // pred_check_branch
      %11 = sbr.rel (0) target = $region5
    $region4: #{tpu_custom_call.1} parent=1 // pred_region
      %s13 = ssub.s32 64, 64
      %14 = vsyncadd [#allocation3], %s13
      %s16 = sshll.u32 [#allocation2], 4
      %s17 = int_to_ptr.vmem [resolvable:$true] %s16
      %19 = dma.hbm_to_vmem [thread:$0]  %s0, 64, %s17, [#allocation3]
    $region5: #{tpu_custom_call.1} parent=1 // pred_fallthru
      _
    // Predicated region
    $region6: #{tpu_custom_call.1} parent=1 // pred_check
      _
    $region7: #{tpu_custom_call.1} parent=1 // pred_check_branch
      %21 = sbr.rel (0) target = $region9
    $region8: #{tpu_custom_call.1} parent=1 // pred_region
      %s23 = ssub.s32 128, 128
      %24 = vsyncadd [#allocation6], %s23
      %s25 = sshll.u32 [#allocation5], 4
      %s26 = int_to_ptr.vmem [resolvable:$true] %s25
      %31 = dma.hbm_to_vmem [thread:$0]  %s1, 128, %s26, [#allocation6], 64, 64, 4
    $region9: #{tpu_custom_call.1} parent=1 // pred_fallthru
      _
    // Predicated region
    $region10: #{tpu_custom_call.1} parent=1 // pred_check
      _
    $region11: #{tpu_custom_call.1} parent=1 // pred_check_branch
      %33 = sbr.rel (0) target = $region13
    $region12: #{tpu_custom_call.1} parent=1 // pred_region
      %34 = dma.done [#allocation3], 64
    $region13: #{tpu_custom_call.1} parent=1 // pred_fallthru
      _
    // Predicated region
    $region14: #{tpu_custom_call.1} parent=1 // pred_check
      _
    $region15: #{tpu_custom_call.1} parent=1 // pred_check_branch
      %36 = sbr.rel (0) target = $region17
    $region16: #{tpu_custom_call.1} parent=1 // pred_region
      %37 = dma.done [#allocation6], 128
    $region17: #{tpu_custom_call.1} parent=1 // pred_fallthru
      _
    %v39 = vld [vmem:[#allocation2] sm:$0xf]
    %v40 = vld [vmem:[#allocation5] sm:$0xf]
    %v41 = vld [vmem:[#allocation5 + $0x4] sm:$0xf]
    %v44 = vunpack.c.l.b16 %v40
    %v45 = vunpack.c.l.b16 %v41
    %v46 = vpack.c.b16 %v45, %v44
    %vm48 = vcmask 130048
    %v50 = vsel %vm48, %v39, 0
    %52 = vmatprep.subr.bf16.mxu0 0
    %53 = vmatpush1.bf16.msra.mxu0 %v46
    %54 = vmatprep.subr.bf16.mxu0 0
    %55 = vmatpush1.bf16.msra.mxu0 0
    %56 = vmatprep.subr.bf16.mxu0 0
    %57 = vmatpush1.bf16.msra.mxu0 0
    %58 = vmatprep.subr.bf16.mxu0 0
    %59 = vmatpush1.bf16.msra.mxu0 0
    %60 = vmatprep.subr.bf16.mxu0 0
    %61 = vmatpush1.bf16.msra.mxu0 0
    %62 = vmatprep.subr.bf16.mxu0 0
    %63 = vmatpush1.bf16.msra.mxu0 0
    %64 = vmatprep.subr.bf16.mxu0 0
    %65 = vmatpush1.bf16.msra.mxu0 0
    %66 = vmatprep.subr.bf16.mxu0 0
    %67 = vmatpush1.bf16.msra.mxu0 0
    %68 = vmatprep.subr.bf16.mxu0 0
    %69 = vmatpush1.bf16.msra.mxu0 0
    %70 = vmatprep.subr.bf16.mxu0 0
    %71 = vmatpush1.bf16.msra.mxu0 0
    %72 = vmatprep.subr.bf16.mxu0 0
    %73 = vmatpush1.bf16.msra.mxu0 0
    %74 = vmatprep.subr.bf16.mxu0 0
    %75 = vmatpush1.bf16.msra.mxu0 0
    %76 = vmatprep.subr.bf16.mxu0 0
    %77 = vmatpush1.bf16.msra.mxu0 0
    %78 = vmatprep.subr.bf16.mxu0 0
    %79 = vmatpush1.bf16.msra.mxu0 0
    %80 = vmatprep.subr.bf16.mxu0 0
    %81 = vmatpush1.bf16.msra.mxu0 0
    %82 = vmatprep.subr.bf16.mxu0 0
    %83 = vmatpush1.bf16.msra.mxu0 0
    %84 = vmatprep.mubr.bf16.mxu0 0
    %85 = vmatmul.mubr.bf16.gmra.mrb[0].mxu0 %v50
    %v86 = vpop.f32.mrb[0].mxu0
    %v87 = vadd.f32 0.0, %v86
    %v88 = vpop.f32.mrb[0].mxu0
    %v89 = vpop.f32.mrb[0].mxu0
    %v90 = vpop.f32.mrb[0].mxu0
    %91 = vdwg.mxu0
    %s92 = smul.u32 0, 8
    %v93 = vlaneseq
    %v94 = vshrl.u32 %v93, 7
    %v95 = vstv %s92
    %v96 = vadd.s32 %v94, %v95
    %vm97 = vcmp.lt.s32.totalorder %v96, 8
    %s98 = ssub.s32 8, %s92
    %p99 = scmp.lt.s32.totalorder %s98, 8
    %s100 = scalar_select %p99, %s98, 8
    %s101 = scvt.s32.f32 %s100
    %v102 = vsel %vm97, 1, 0
    %vm103 = vcmp.eq.s32.totalorder %v102, 1
    %v104 = vsel %vm103, %v87, 0.0
    %v105 = vrot.slane %v104, 4
    %v106 = vadd.f32 %v104, %v105
    %v107 = vrot.slane %v106, 2
    %v108 = vadd.f32 %v106, %v107
    %v109 = vrot.slane %v108, 1
    %v110 = vadd.f32 %v108, %v109
    %v111 = vstv %s101
    %v112 = vrcp.pop %v111
    %v113 = vmul.f32 %v110, %v112
    %v114 = vsub.f32 %v87, %v113
    %v115 = vsel %vm103, %v114, 0.0
    %v116 = vmul.f32 %v115, %v115
    %v117 = vrot.slane %v116, 4
    %v118 = vadd.f32 %v116, %v117
    %v119 = vrot.slane %v118, 2
    %v120 = vadd.f32 %v118, %v119
    %v121 = vrot.slane %v120, 1
    %v122 = vadd.f32 %v120, %v121
    %p123 = scmp.eq.s32.totalorder 0, 0
    // Predicated region
    $region18: #{tpu_custom_call.1} parent=1 // pred_check
      %p124 = pneg %p123
    $region19: #{tpu_custom_call.1} parent=1 // pred_check_branch
      %126 = sbr.rel (%p124) target = $region21
    $region20: #{tpu_custom_call.1} parent=1 // pred_region
      %127 = vst [vmem:[#allocation7] sm:$0x1] %v113
      %128 = vst [vmem:[#allocation7 + $0x1] sm:$0x1] %v122
    $region21: #{tpu_custom_call.1} parent=1 // pred_fallthru
      _
    %p129 = scmp.gt.s32.totalorder 0, 0
    // Predicated region
    $region22: #{tpu_custom_call.1} parent=1 // pred_check
      %p130 = pneg %p129
    $region23: #{tpu_custom_call.1} parent=1 // pred_check_branch
      %132 = sbr.rel (%p130) target = $region25
    $region24: #{tpu_custom_call.1} parent=1 // pred_region
      %s133 = scvt.s32.f32 %s92
      %s134 = sadd.f32 %s133, %s101
      %v135 = vld [vmem:[#allocation7] sm:$0x1]
      %v136 = vld [vmem:[#allocation7 + $0x1] sm:$0x1]
      %v137 = vsub.f32 %v113, %v135
      %v138 = vstv %s134
      %v139 = vrcp.pop %v138
      %s140 = vtos %v139
      %s141 = smul.f32 %s101, %s140
      %v142 = vstv %s141
      %v143 = vmul.f32 %v137, %v142
      %v144 = vadd.f32 %v135, %v143
      %145 = vst [vmem:[#allocation7] sm:$0x1] %v144
      %v146 = vadd.f32 %v136, %v122
      %v147 = vmul.f32 %v137, %v137
      %s148 = smul.f32 %s133, %s101
      %v149 = vstv %s134
      %v150 = vrcp.pop %v149
      %s151 = vtos %v150
      %s152 = smul.f32 %s148, %s151
      %v153 = vstv %s152
      %v154 = vmul.f32 %v147, %v153
      %v155 = vadd.f32 %v146, %v154
      %156 = vst [vmem:[#allocation7 + $0x1] sm:$0x1] %v155
    $region25: #{tpu_custom_call.1} parent=1 // pred_fallthru
      _
    // Predicated region
    $region26: #{tpu_custom_call.1} parent=1 // pred_check
      %p157 = pneg %p123
    $region27: #{tpu_custom_call.1} parent=1 // pred_check_branch
      %159 = sbr.rel (%p157) target = $region29
    $region28: #{tpu_custom_call.1} parent=1 // pred_region
      %v160 = vld [vmem:[#allocation7 + $0x1] sm:$0x1]
      %v161 = vmul.f32 %v160, 0.125
      %162 = vst [vmem:[#allocation7 + $0x1] sm:$0x1] %v161
    $region29: #{tpu_custom_call.1} parent=1 // pred_fallthru
      _
    // Predicated region
    $region30: #{tpu_custom_call.1} parent=1 // pred_check
      _
    $region31: #{tpu_custom_call.1} parent=1 // pred_check_branch
      %164 = sbr.rel (0) target = $region33
    $region32: #{tpu_custom_call.1} parent=1 // pred_region
      %s166 = ssub.s32 32, 32
      %167 = vsyncadd [#allocation4], %s166
      %s169 = sshll.u32 [#allocation7], 4
      %s170 = int_to_ptr.vmem [resolvable:$true] %s169
      %172 = dma.vmem_to_hbm [thread:$0]  %s170, 32, %s2, [#allocation4]
    $region33: #{tpu_custom_call.1} parent=1 // pred_fallthru
      _
    // Predicated region
    $region34: #{tpu_custom_call.1} parent=1 // pred_check
      _
    $region35: #{tpu_custom_call.1} parent=1 // pred_check_branch
      %174 = sbr.rel (0) target = $region37
    $region36: #{tpu_custom_call.1} parent=1 // pred_region
      %175 = dma.done [#allocation4], 32
    $region37: #{tpu_custom_call.1} parent=1 // pred_fallthru
      _
    %176 = vsyncpa [#allocation3], 1
    %177 = vsyncpa [#allocation6], 1
    %178 = vsyncpa [#allocation4], 1

</llo_original>
